<compile_context>
chip_gen: v6e
topology: v6e:2x2x1
jax: 0.10.0
libtpu: 0.0.40
codegen_flags: <defaults>
</compile_context>

<pallas_src>
import jax
import jax.numpy as jnp
from jax.experimental import pallas as pl
from jax.experimental.pallas import tpu as pltpu

_LANES = 128


def _cdiv(a, b):
    return -(-a // b)


def _softmax0_kernel(x_ref, o_ref):
    # One (N, TD) column tile. Softmax over axis 0 is column-independent, so the
    # whole reduction stays local to the tile.
    x = x_ref[...].astype(jnp.float32)                 # f32 exp path (needed on v5e)
    x_exp = jnp.exp(x)
    partition = jnp.sum(x_exp, axis=0, keepdims=True)  # (1, TD)
    # Exact divide (not approx reciprocal): columns must sum to 1; mem-bound so free.
    o_ref[...] = (x_exp / partition).astype(o_ref.dtype)


def _vmem_sizes():
    """(per-call block budget, vmem_limit_bytes), scaled to this generation's VMEM."""
    try:
        cap = int(pltpu.get_tpu_info().vmem_capacity_bytes)
    except Exception:
        cap = 64 * 1024 * 1024                         # conservative (v7x-sized) default
    budget = max(16 * 1024 * 1024, (cap * 3) // 8)     # v7x: ~24 MiB; v5e/v6e: ~48 MiB
    limit = min(cap - 16 * 1024 * 1024, budget + 16 * 1024 * 1024)
    limit = max(limit, 32 * 1024 * 1024)
    return budget, limit


def _choose_tile_d(n_rows, d, io_itemsize, budget):
    """Widest 128-multiple tile fitting the budget, balanced over D, >=2 tiles if possible."""
    d128 = _cdiv(d, _LANES) * _LANES
    # Resident bytes per tile column: double-buffered in + out blocks at the real
    # I/O itemsize, plus ~2 f32 temporaries (x_exp, scaled result) of scratch.
    bytes_per_col = n_rows * (4 * io_itemsize + 2 * 4)
    max_td = (budget // bytes_per_col) // _LANES * _LANES
    if max_td < _LANES:
        return None                                    # even an (N, 128) block won't fit
    num_tiles = _cdiv(d128, max_td)
    # Give the "parallel" axis at least 2 steps when there's enough width so both
    # TensorCores on v7x get work (columns are independent -> the split is free).
    if num_tiles < 2 and d128 >= 2 * _LANES:
        num_tiles = 2
    td = _LANES * _cdiv(d128 // _LANES, num_tiles)     # balanced tiles, minimal round-up
    return td


def _xla_softmax0(x):
    # Fallback path; upcast to f32 like the kernel so both dispatch paths agree.
    x_exp = jnp.exp(x.astype(jnp.float32))
    y = x_exp / jnp.sum(x_exp, axis=0, keepdims=True)
    return y.astype(x.dtype)


def _softmax0_pallas_2d(x):
    n, d = x.shape
    budget, vmem_limit = _vmem_sizes()
    td = _choose_tile_d(n, d, jnp.dtype(x.dtype).itemsize, budget)
    if td is None:
        # TODO(synk): add an N-tiled two-pass reduction (column-sum scratch + rescale)
        # for N too tall to fit an (N, 128) block in VMEM; fall back to XLA for now.
        return _xla_softmax0(x)

    grid = (_cdiv(d, td),)
    # No wrapper pad / slice: Pallas masks the ragged last 128-lane remainder itself
    # (padded reads are confined to garbage columns whose writes are dropped).
    return pl.pallas_call(
        _softmax0_kernel,
        out_shape=jax.ShapeDtypeStruct((n, d), x.dtype),
        grid_spec=pltpu.PrefetchScalarGridSpec(
            num_scalar_prefetch=0,
            grid=grid,
            in_specs=[pl.BlockSpec((n, td), lambda j: (0, j))],
            out_specs=pl.BlockSpec((n, td), lambda j: (0, j)),
        ),
        compiler_params=pltpu.CompilerParams(
            # Column tiles are fully independent -> parallel (dual-TC on v7x).
            dimension_semantics=("parallel",),
            vmem_limit_bytes=vmem_limit,
        ),
    )(x)


def my_softmax(x, *, force_pallas=False):
    """Pallas equivalent of MySoftMax.forward: exp(x) / exp(x).sum(0, keepdims=True)."""
    orig_shape = x.shape
    x2 = x if x.ndim == 2 else x.reshape(x.shape[0], -1)
    d = x2.shape[1]

    # Tiny inputs (launch overhead dominates) and very narrow D (< 64: a lone
    # 128-lane block is mostly padding) -> let XLA fuse it.
    if not force_pallas and (x2.size < 16384 or d < 64):
        return _xla_softmax0(x)

    y2 = _softmax0_pallas_2d(x2)
    return y2.reshape(orig_shape)


def _reference(x):
    x_exp = jnp.exp(x)
    return x_exp / jnp.sum(x_exp, axis=0, keepdims=True)


if __name__ == "__main__":
    key = jax.random.PRNGKey(0)
    k0, k1 = jax.random.split(key)

    # Small shape consistent with the module (seq=8, hidden=32); force the Pallas
    # path so the kernel itself is exercised (single partial 128-lane block).
    x_small = jax.random.normal(k0, (8, 32), dtype=jnp.float32)
    y_small = jax.block_until_ready(my_softmax(x_small, force_pallas=True))
    ref_small = _reference(x_small)
    assert jnp.allclose(y_small, ref_small, atol=1e-5, rtol=1e-5), "small-shape mismatch"
    assert bool(jnp.allclose(jnp.sum(y_small, axis=0), 1.0, atol=1e-4)), "columns must sum to 1"

    # Larger ragged-width shape exercising balanced D-tiling + the masked last tile
    # (1234 -> two 640-wide tiles, no wrapper pad/slice).
    x_big = jax.random.normal(k1, (64, 1234), dtype=jnp.float32)
    y_big = jax.block_until_ready(my_softmax(x_big))
    ref_big = _reference(x_big)
    assert jnp.allclose(y_big, ref_big, atol=1e-5, rtol=1e-5), "tiled-shape mismatch"
    assert bool(jnp.allclose(jnp.sum(y_big, axis=0), 1.0, atol=1e-4)), "columns must sum to 1"

    print("KERNEL_OK")
</pallas_src>

<mosaic_0001>
module attributes {stable_mosaic.version = 11 : i64} {
  func.func @_softmax0_kernel(%arg0: i32, %arg1: memref<8x128xf32, #tpu.memory_space<vmem>>, %arg2: memref<8x128xf32, #tpu.memory_space<vmem>>) attributes {dimension_semantics = [#tpu.dimension_semantics<parallel>], iteration_bounds = array<i64: 1>, scalar_prefetch = 0 : i64, scratch_operands = 0 : i64, tpu.core_type = #tpu.core_type<tc>, window_params = [{transform_indices = @transform_0, window_bounds = array<i64: 8, 128>}, {transform_indices = @transform_1, window_bounds = array<i64: 8, 128>}]} {
    %c0 = arith.constant 0 : index
    %c0_0 = arith.constant 0 : index
    %0 = vector.load %arg1[%c0, %c0_0] : memref<8x128xf32, #tpu.memory_space<vmem>>, vector<8x128xf32>
    %1 = math.exp %0 : vector<8x128xf32>
    %cst = arith.constant dense<0.000000e+00> : vector<128xf32>
    %2 = vector.multi_reduction <add>, %1, %cst [0] : vector<8x128xf32> to vector<128xf32>
    %3 = vector.shape_cast %2 : vector<128xf32> to vector<1x128xf32>
    %4 = vector.broadcast %3 : vector<1x128xf32> to vector<8x128xf32>
    %5 = arith.divf %1, %4 : vector<8x128xf32>
    %c0_1 = arith.constant 0 : index
    %c0_2 = arith.constant 0 : index
    %6 = vector.load %arg2[%c0_1, %c0_2] : memref<8x128xf32, #tpu.memory_space<vmem>>, vector<8x128xf32>
    tpu.vector_store %arg2[%c0_1, %c0_2], %5 {strides = array<i32>} : memref<8x128xf32, #tpu.memory_space<vmem>>, vector<8x128xf32>,
    return
  }
  func.func @transform_0(%arg0: i32) -> (i32, i32) {
    %c0_i32 = arith.constant 0 : i32
    %c0_i32_0 = arith.constant 0 : i32
    return %c0_i32, %arg0 : i32, i32
  }
  func.func @transform_1(%arg0: i32) -> (i32, i32) {
    %c0_i32 = arith.constant 0 : i32
    %c0_i32_0 = arith.constant 0 : i32
    return %c0_i32, %arg0 : i32, i32
  }
}

</mosaic_0001>

<llo_original>
// kernel: tpu_custom_call.1
$region0: #{tpu_custom_call.1}
  #allocation0 [shape = 'u32[]', space=smem, size = 0x4, offset = 0x4, fixed_abs, tag = 'smem constant byte address 0x4 - core index']
  #allocation1 [shape = 'u32[144,128]{1,0:T(1,128)}', space=vmem, size = 0x12000, scoped, tag = 'internal scratch']
  %s0 = inlined_call_operand.hbm [shape: f32[8,32], index: 0, kind: input, shape index: {}]
  %s1 = inlined_call_operand.hbm [shape: f32[8,32], index: 1, kind: output, shape index: {}]
  %s2 = sld [smem:[#allocation0]]
  $region18: #{tpu_custom_call.1} parent=0
    _
  %s4 = ssub.s32 1, %s2
  %s5 = scalar_select 0, %s4, %s2
  $region1: #{tpu_custom_call.1} parent=0
    #allocation2 [shape = 'u8[4096]{0}', space=vmem, size = 0x1000, scoped, tag = 'input window, operand 0, single buffered']
    #allocation3 [shape = 's32[1]{0}', space=sflag, size = 0x4, scoped, tag = 'scoped memory for tpu_custom_call.1']
    #allocation4 [shape = 's32[1]{0}', space=sflag, size = 0x4, scoped, tag = 'scoped memory for tpu_custom_call.1']
    #allocation5 [shape = 'u8[4096]{0}', space=vmem, size = 0x1000, scoped, tag = 'output window, operand 0, single buffered']
    %6 = vsyncpa [#allocation3], 0
    %7 = vsyncpa [#allocation4], 0
    // Predicated region
    $region2: #{tpu_custom_call.1} parent=1 // pred_check
      _
    $region3: #{tpu_custom_call.1} parent=1 // pred_check_branch
      %9 = sbr.rel (0) target = $region5
    $region4: #{tpu_custom_call.1} parent=1 // pred_region
      %s11 = ssub.s32 128, 128
      %12 = vsyncadd [#allocation3], %s11
      %s14 = sshll.u32 [#allocation2], 4
      %s15 = int_to_ptr.vmem [resolvable:$true] %s14
      %17 = dma.hbm_to_vmem [thread:$0]  %s0, 128, %s15, [#allocation3]
    $region5: #{tpu_custom_call.1} parent=1 // pred_fallthru
      _
    // Predicated region
    $region6: #{tpu_custom_call.1} parent=1 // pred_check
      _
    $region7: #{tpu_custom_call.1} parent=1 // pred_check_branch
      %19 = sbr.rel (0) target = $region9
    $region8: #{tpu_custom_call.1} parent=1 // pred_region
      %20 = dma.done [#allocation3], 128
    $region9: #{tpu_custom_call.1} parent=1 // pred_fallthru
      _
    %v21 = vld [vmem:[#allocation2] sm:$0xff]
    %v22 = vmul.f32 %v21, 1.442695
    %v23 = vpow.pop %v22
    %v24 = vrot.slane %v23, 4
    %v25 = vadd.f32 %v23, %v24
    %v26 = vrot.slane %v25, 2
    %v27 = vadd.f32 %v25, %v26
    %v28 = vrot.slane %v27, 1
    %v29 = vadd.f32 %v27, %v28
    %v30 = vrcp.pop %v29
    %v31 = vmul.f32 %v23, %v30
    %32 = vst [vmem:[#allocation5] sm:$0xff] %v31
    // Predicated region
    $region10: #{tpu_custom_call.1} parent=1 // pred_check
      _
    $region11: #{tpu_custom_call.1} parent=1 // pred_check_branch
      %34 = sbr.rel (0) target = $region13
    $region12: #{tpu_custom_call.1} parent=1 // pred_region
      %s36 = ssub.s32 128, 128
      %37 = vsyncadd [#allocation4], %s36
      %s39 = sshll.u32 [#allocation5], 4
      %s40 = int_to_ptr.vmem [resolvable:$true] %s39
      %42 = dma.vmem_to_hbm [thread:$0]  %s40, 128, %s1, [#allocation4]
    $region13: #{tpu_custom_call.1} parent=1 // pred_fallthru
      _
    // Predicated region
    $region14: #{tpu_custom_call.1} parent=1 // pred_check
      _
    $region15: #{tpu_custom_call.1} parent=1 // pred_check_branch
      %44 = sbr.rel (0) target = $region17
    $region16: #{tpu_custom_call.1} parent=1 // pred_region
      %45 = dma.done [#allocation4], 128
    $region17: #{tpu_custom_call.1} parent=1 // pred_fallthru
      _
    %46 = vsyncpa [#allocation3], 1
    %47 = vsyncpa [#allocation4], 1

</llo_original>
